<compile_context>
chip_gen: v6e
topology: v6e:2x2x1
jax: 0.10.0
libtpu: 0.0.40
codegen_flags: <defaults>
</compile_context>

<pallas_src>
import numpy as np

import jax
import jax.numpy as jnp
from jax.experimental import pallas as pl
from jax.experimental.pallas import tpu as pltpu


def _drop_path_kernel(x_ref, mask_ref, o_ref):
    # x_ref: (TR, TC) tile; mask_ref: (TR, 1) per-row keep mask already scaled by
    # 1/keep_prob (in x dtype).  One broadcast multiply per element.
    o_ref[...] = x_ref[...] * mask_ref[...]


def _round_up(x, m):
    return (x + m - 1) // m * m


def _round_down_min(x, m):
    return max(m, (x // m) * m)


def _choose_cols(batch, feat):
    """Pick a lane extent that (a) divides the per-sample feature count so every
    flattened row belongs to exactly one sample, and (b) keeps >= 8 total sublane
    rows even for small batches.  Returns None if feat is not a multiple of 128."""
    for cols in (1024, 512, 256, 128):
        if feat % cols == 0 and (batch * (feat // cols) >= 8 or cols == 128):
            return cols
    return None


def drop_path(x, drop_prob: float = 0.0, is_training: bool = False, *,
              key=None, seed: int = 0, target_tile_bytes: int = 4 * 1024 * 1024):
    """JAX/Pallas equivalent of the PyTorch drop_path function."""
    if drop_prob == 0.0 or not is_training:
        return x
    keep_prob = 1.0 - float(drop_prob)

    if key is None:
        key = jax.random.PRNGKey(seed)

    orig_shape = x.shape
    b = int(orig_shape[0])
    f = int(np.prod(orig_shape[1:])) if len(orig_shape) > 1 else 1
    itemsize = jnp.dtype(x.dtype).itemsize

    # Per-sample scaled mask: floor(U[0,1) + keep_prob) in {0,1}, times 1/keep_prob.
    # (For bf16 inputs the stored 1/keep_prob differs from PyTorch's x.div() by <=1 ulp.)
    u = jax.random.uniform(key, (b, 1), dtype=jnp.float32)
    scaled_mask = (jnp.floor(u + jnp.float32(keep_prob)) *
                   jnp.float32(1.0 / keep_prob)).astype(x.dtype)

    cols = _choose_cols(b, f)
    if cols is not None:
        r = f // cols
        rows = b * r
        x2 = x.reshape(rows, cols)                      # lane-dense, sublane-full rows
        row_mask = jnp.repeat(scaled_mask, r, axis=0)   # (rows, 1) -- trivially small
    else:
        # Feature count not a multiple of 128: keep (B, F); partial edge blocks are
        # masked by Pallas.  Not numerically different, just less lane-efficient.
        rows, cols = b, f
        x2 = x.reshape(rows, cols)
        row_mask = scaled_mask

    # ---- tile selection (no divisibility requirement; cdiv handles edges) ----
    if cols % 128 == 0:
        tc = min(cols, 2048)
    elif cols <= 2048:
        tc = cols                       # full axis (always legal)
    else:
        tc = 2048                       # multiple of 128; edge block masked by Pallas

    tr_budget = _round_down_min(target_tile_bytes // (tc * itemsize), 256)
    tr = rows if rows <= tr_budget else tr_budget

    grid = (pl.cdiv(rows, tr), pl.cdiv(cols, tc))

    # Explicit VMEM budget from *padded* block bytes, 2 buffers per operand + slack,
    # so the same tile target is portable across v5e/v6e/v7x scoped-VMEM defaults.
    sub = 8 * max(1, 4 // itemsize)                      # sublane pack: 8 / 16 / 32 rows
    x_blk = _round_up(tr, sub) * _round_up(tc, 128) * itemsize
    m_blk = _round_up(tr, sub) * 128 * itemsize          # (TR, 1) pads to 128 lanes
    vmem_limit = int(2 * (2 * x_blk + m_blk) + (2 << 20))

    out = pl.pallas_call(
        _drop_path_kernel,
        out_shape=jax.ShapeDtypeStruct((rows, cols), x.dtype),
        grid=grid,
        in_specs=[
            pl.BlockSpec((tr, tc), lambda i, j: (i, j)),   # x tile
            pl.BlockSpec((tr, 1), lambda i, j: (i, 0)),    # per-row scaled mask
        ],
        out_specs=pl.BlockSpec((tr, tc), lambda i, j: (i, j)),
        compiler_params=pltpu.CompilerParams(
            dimension_semantics=("parallel", "parallel"),  # shard across TCs on v7x
            vmem_limit_bytes=vmem_limit),
    )(x2, row_mask)
    return out.reshape(orig_shape)


class DropPath:
    """Stochastic-depth module mirroring the PyTorch DropPath."""

    def __init__(self, drop_prob=None):
        self.drop_prob = drop_prob if drop_prob is not None else 0.0
        self.training = True  # PyTorch modules default to training mode

    def __call__(self, x, key=None, seed: int = 0):
        return drop_path(x, self.drop_prob, self.training, key=key, seed=seed)


if __name__ == "__main__":
    key = jax.random.PRNGKey(0)
    x = jax.random.normal(key, (2, 4, 16, 16), dtype=jnp.float32)  # NCHW

    # Training mode: per-sample drop with drop_prob = 0.25
    module = DropPath(drop_prob=0.25)
    module.training = True
    y = jax.block_until_ready(module(x, seed=1234))

    # Sanity: each sample is either all-zero or exactly x / keep_prob.
    keep_prob = 1.0 - 0.25
    y_np = np.asarray(y)
    x_np = np.asarray(x)
    for bi in range(x_np.shape[0]):
        dropped = np.allclose(y_np[bi], 0.0)
        kept = np.allclose(y_np[bi], x_np[bi] / keep_prob, rtol=1e-5, atol=1e-5)
        assert dropped or kept, "per-sample mask semantics violated"

    # Eval mode: identity.
    module.training = False
    y_eval = jax.block_until_ready(module(x))
    assert np.allclose(np.asarray(y_eval), x_np)

    print("KERNEL_OK")
</pallas_src>

<mosaic_0001>
module attributes {stable_mosaic.version = 11 : i64} {
  func.func @_drop_path_kernel(%arg0: i32, %arg1: i32, %arg2: memref<8x256xf32, #tpu.memory_space<vmem>>, %arg3: memref<8x1xf32, #tpu.memory_space<vmem>>, %arg4: memref<8x256xf32, #tpu.memory_space<vmem>>) attributes {dimension_semantics = [#tpu.dimension_semantics<parallel>, #tpu.dimension_semantics<parallel>], iteration_bounds = array<i64: 1, 1>, scalar_prefetch = 0 : i64, scratch_operands = 0 : i64, tpu.core_type = #tpu.core_type<tc>, window_params = [{transform_indices = @transform_0, window_bounds = array<i64: 8, 256>}, {transform_indices = @transform_1, window_bounds = array<i64: 8, 1>}, {transform_indices = @transform_2, window_bounds = array<i64: 8, 256>}]} {
    %c0 = arith.constant 0 : index
    %c0_0 = arith.constant 0 : index
    %0 = vector.load %arg2[%c0, %c0_0] : memref<8x256xf32, #tpu.memory_space<vmem>>, vector<8x256xf32>
    %c0_1 = arith.constant 0 : index
    %c0_2 = arith.constant 0 : index
    %1 = vector.load %arg3[%c0_1, %c0_2] : memref<8x1xf32, #tpu.memory_space<vmem>>, vector<8x1xf32>
    %2 = vector.broadcast %1 : vector<8x1xf32> to vector<8x256xf32>
    %3 = arith.mulf %0, %2 : vector<8x256xf32>
    %c0_3 = arith.constant 0 : index
    %c0_4 = arith.constant 0 : index
    %4 = vector.load %arg4[%c0_3, %c0_4] : memref<8x256xf32, #tpu.memory_space<vmem>>, vector<8x256xf32>
    tpu.vector_store %arg4[%c0_3, %c0_4], %3 {strides = array<i32>} : memref<8x256xf32, #tpu.memory_space<vmem>>, vector<8x256xf32>,
    return
  }
  func.func @transform_0(%arg0: i32, %arg1: i32) -> (i32, i32) {
    %c0_i32 = arith.constant 0 : i32
    return %arg0, %arg1 : i32, i32
  }
  func.func @transform_1(%arg0: i32, %arg1: i32) -> (i32, i32) {
    %c0_i32 = arith.constant 0 : i32
    %c0_i32_0 = arith.constant 0 : i32
    return %arg0, %c0_i32 : i32, i32
  }
  func.func @transform_2(%arg0: i32, %arg1: i32) -> (i32, i32) {
    %c0_i32 = arith.constant 0 : i32
    return %arg0, %arg1 : i32, i32
  }
}

</mosaic_0001>

<llo_original>
// kernel: tpu_custom_call.1
$region0: #{tpu_custom_call.1}
  #allocation0 [shape = 'u32[]', space=smem, size = 0x4, offset = 0x4, fixed_abs, tag = 'smem constant byte address 0x4 - core index']
  #allocation1 [shape = 'u32[144,128]{1,0:T(1,128)}', space=vmem, size = 0x12000, scoped, tag = 'internal scratch']
  %s0 = inlined_call_operand.hbm [shape: f32[8,256], index: 0, kind: input, shape index: {}]
  %s1 = inlined_call_operand.vmem [shape: f32[8,1], index: 1, kind: input, shape index: {}]
  %s2 = inlined_call_operand.hbm [shape: f32[8,256], index: 2, kind: output, shape index: {}]
  %s3 = sld [smem:[#allocation0]]
  $region22: #{tpu_custom_call.1} parent=0
    _
  %s5 = ssub.s32 1, %s3
  %s6 = scalar_select 0, %s5, %s3
  $region1: #{tpu_custom_call.1} parent=0
    #allocation2 [shape = 'u8[8192]{0}', space=vmem, size = 0x2000, scoped, tag = 'input window, operand 0, single buffered']
    #allocation3 [shape = 's32[1]{0}', space=sflag, size = 0x4, scoped, tag = 'scoped memory for tpu_custom_call.1']
    #allocation4 [shape = 's32[1]{0}', space=sflag, size = 0x4, scoped, tag = 'scoped memory for tpu_custom_call.1']
    #allocation5 [shape = 'u8[8192]{0}', space=vmem, size = 0x2000, scoped, tag = 'output window, operand 0, single buffered']
    %7 = vsyncpa [#allocation3], 0
    %8 = vsyncpa [#allocation4], 0
    // Predicated region
    $region2: #{tpu_custom_call.1} parent=1 // pred_check
      _
    $region3: #{tpu_custom_call.1} parent=1 // pred_check_branch
      %10 = sbr.rel (0) target = $region5
    $region4: #{tpu_custom_call.1} parent=1 // pred_region
      %s12 = ssub.s32 256, 256
      %13 = vsyncadd [#allocation3], %s12
      %s15 = sshll.u32 [#allocation2], 4
      %s16 = int_to_ptr.vmem [resolvable:$true] %s15
      %18 = dma.hbm_to_vmem [thread:$0]  %s0, 256, %s16, [#allocation3]
    $region5: #{tpu_custom_call.1} parent=1 // pred_fallthru
      _
    // Predicated region
    $region6: #{tpu_custom_call.1} parent=1 // pred_check
      _
    $region7: #{tpu_custom_call.1} parent=1 // pred_check_branch
      %20 = sbr.rel (0) target = $region9
    $region8: #{tpu_custom_call.1} parent=1 // pred_region
      _
    $region9: #{tpu_custom_call.1} parent=1 // pred_fallthru
      _
    // Predicated region
    $region10: #{tpu_custom_call.1} parent=1 // pred_check
      _
    $region11: #{tpu_custom_call.1} parent=1 // pred_check_branch
      %22 = sbr.rel (0) target = $region13
    $region12: #{tpu_custom_call.1} parent=1 // pred_region
      %23 = dma.done [#allocation3], 256
    $region13: #{tpu_custom_call.1} parent=1 // pred_fallthru
      _
    %v24 = vld [vmem:[#allocation2] sm:$0xff]
    %v25 = vld [vmem:[#allocation2 + $0x8] sm:$0xff]
    %v26 = vld [vmem:[%s1] sm:$0xff]
    %28 = vset.pattern.permute.xlu0 0
    %29 = vperm.xlu0 %28, %v26
    %v30 = vpop.permute.xlu0 %29
    %v32 = vmul.f32 %v24, %v30
    %v33 = vmul.f32 %v25, %v30
    %34 = vst [vmem:[#allocation5] sm:$0xff] %v32
    %35 = vst [vmem:[#allocation5 + $0x8] sm:$0xff] %v33
    // Predicated region
    $region14: #{tpu_custom_call.1} parent=1 // pred_check
      _
    $region15: #{tpu_custom_call.1} parent=1 // pred_check_branch
      %37 = sbr.rel (0) target = $region17
    $region16: #{tpu_custom_call.1} parent=1 // pred_region
      %s39 = ssub.s32 256, 256
      %40 = vsyncadd [#allocation4], %s39
      %s42 = sshll.u32 [#allocation5], 4
      %s43 = int_to_ptr.vmem [resolvable:$true] %s42
      %45 = dma.vmem_to_hbm [thread:$0]  %s43, 256, %s2, [#allocation4]
    $region17: #{tpu_custom_call.1} parent=1 // pred_fallthru
      _
    // Predicated region
    $region18: #{tpu_custom_call.1} parent=1 // pred_check
      _
    $region19: #{tpu_custom_call.1} parent=1 // pred_check_branch
      %47 = sbr.rel (0) target = $region21
    $region20: #{tpu_custom_call.1} parent=1 // pred_region
      %48 = dma.done [#allocation4], 256
    $region21: #{tpu_custom_call.1} parent=1 // pred_fallthru
      _
    %49 = vsyncpa [#allocation3], 1
    %50 = vsyncpa [#allocation4], 1

</llo_original>
